<compile_context>
chip_gen: v7x
topology: tpu7x:2x2x1
jax: 0.10.0
libtpu: 0.0.40
codegen_flags: <defaults>
</compile_context>

<pallas_src>
import jax
import jax.numpy as jnp
from jax.experimental import pallas as pl
from jax.experimental.pallas import tpu as pltpu

LANE = 128
NEG_INF = -1e30        # running-max init (must be > ADJ_MASK)
ADJ_MASK = -3e38       # additive mask for non-edges (bf16-representable)
VMEM_LIMIT = 48 * 1024 * 1024   # v7x-safe (64 MiB physical per TC)


def _round_up(v, m):
    return (v + m - 1) // m * m


# ---------------------------------------------------------------------------
# Kernel 1: GATv2 projection (all layers).
#   xl = h @ Wl + bl   (source / lin_l),   xr = h @ Wr + br   (target / lin_r)
# Layer 1 uses h = [x | s_col | deg] and weights with the edge_emb Linear
# folded in (exact algebra, done host-side on the weights).
# ---------------------------------------------------------------------------
def proj_kernel(h_ref, wl_ref, bl_ref, wr_ref, br_ref, xl_ref, xr_ref):
    hb = h_ref[...].astype(jnp.bfloat16)
    xl = jnp.dot(hb, wl_ref[...], preferred_element_type=jnp.float32) + bl_ref[...]
    xr = jnp.dot(hb, wr_ref[...], preferred_element_type=jnp.float32) + br_ref[...]
    xl_ref[...] = xl.astype(jnp.bfloat16)
    xr_ref[...] = xr.astype(jnp.bfloat16)


def gat_project(h, wl, bl, wr, br, *, tm=128):
    Np, K = h.shape
    Hp = wl.shape[1]
    nm = Np // tm
    full = lambda shape: pl.BlockSpec(shape, lambda i: (0,) * len(shape))
    return pl.pallas_call(
        proj_kernel,
        out_shape=(jax.ShapeDtypeStruct((Np, Hp), jnp.bfloat16),
                   jax.ShapeDtypeStruct((Np, Hp), jnp.bfloat16)),
        grid_spec=pltpu.PrefetchScalarGridSpec(
            num_scalar_prefetch=0, grid=(nm,),
            in_specs=[pl.BlockSpec((tm, K), lambda i: (i, 0)),
                      full((K, Hp)), full((1, Hp)),
                      full((K, Hp)), full((1, Hp))],
            out_specs=[pl.BlockSpec((tm, Hp), lambda i: (i, 0)),
                       pl.BlockSpec((tm, Hp), lambda i: (i, 0))]),
        compiler_params=pltpu.CompilerParams(
            dimension_semantics=("parallel",), vmem_limit_bytes=VMEM_LIMIT),
    )(h, wl, bl, wr, br)


# ---------------------------------------------------------------------------
# Kernel 2: flash-style GATv2 attention + aggregation, fused bias + ReLU.
#   grid = (q_tiles, kv_tiles); online softmax over kv tiles.
# ---------------------------------------------------------------------------
def gat_flash_kernel(xr_ref, xl_ref, adj_ref, bias_ref, att08_ref, att02_ref,
                     o_ref, m_scr, l_scr, acc_scr):
    kk = pl.program_id(1)

    @pl.when(kk == 0)
    def _():
        m_scr[...] = jnp.full(m_scr.shape, NEG_INF, m_scr.dtype)
        l_scr[...] = jnp.zeros(l_scr.shape, l_scr.dtype)
        acc_scr[...] = jnp.zeros(acc_scr.shape, acc_scr.dtype)

    xr = xr_ref[...]                      # [tq, Hp] bf16  (targets, lin_r)
    xl = xl_ref[...]                      # [tk, Hp] bf16  (sources, lin_l)

    # GATv2 score: e[i,j] = att . LeakyReLU_{0.2}(xl[j] + xr[i]).
    # LeakyReLU(s) = 0.2*s + 0.8*relu(s).  The 0.2*att.xr[i] part is constant
    # along j -> cancels in the softmax and is dropped; the 0.2*att.xl[j] part
    # is a single M=1 MXU matvec; only the relu part needs the [tq,tk,Hp] slab.
    s = jnp.maximum(xr[:, None, :] + xl[None, :, :], 0)            # bf16 slab
    e = jnp.sum(s * att08_ref[...], axis=-1, dtype=jnp.float32)    # [tq, tk]
    al = jax.lax.dot_general(att02_ref[...], xl,
                             (((1,), (1,)), ((), ())),
                             preferred_element_type=jnp.float32)   # [1, tk]
    e = e + al + adj_ref[...]             # adj: additive 0 / -3e38 mask

    m_prev = m_scr[...]
    m_new = jnp.maximum(m_prev, jnp.max(e, axis=-1, keepdims=True))
    corr = jnp.exp(m_prev - m_new)
    p = jnp.exp(e - m_new)                # masked entries underflow to 0
    l_scr[...] = corr * l_scr[...] + jnp.sum(p, axis=-1, keepdims=True)
    acc_scr[...] = corr * acc_scr[...] + jnp.dot(
        p.astype(jnp.bfloat16), xl, preferred_element_type=jnp.float32)
    m_scr[...] = m_new

    @pl.when(kk == pl.num_programs(1) - 1)
    def _():
        inv = pl.reciprocal(jnp.maximum(l_scr[...], 1e-20), approx=True)
        o_ref[...] = jnp.maximum(acc_scr[...] * inv + bias_ref[...], 0.0)
        # TODO(synk): F.dropout(p=0.2) omitted — module evaluated with training=False.


def gat_flash(xr, xl, adj, bias, att08, att02, *, tq=128, tk=128):
    Np, Hp = xl.shape
    nq, nk = Np // tq, Np // tk
    return pl.pallas_call(
        gat_flash_kernel,
        out_shape=jax.ShapeDtypeStruct((Np, Hp), jnp.float32),
        grid_spec=pltpu.PrefetchScalarGridSpec(
            num_scalar_prefetch=0, grid=(nq, nk),
            in_specs=[
                pl.BlockSpec((tq, Hp), lambda i, k: (i, 0)),    # xr (targets)
                pl.BlockSpec((tk, Hp), lambda i, k: (k, 0)),    # xl (sources)
                pl.BlockSpec((tq, tk), lambda i, k: (i, k)),    # additive adj mask
                pl.BlockSpec((1, Hp), lambda i, k: (0, 0)),     # conv bias
                pl.BlockSpec((1, Hp), lambda i, k: (0, 0)),     # 0.8*att
                pl.BlockSpec((1, Hp), lambda i, k: (0, 0)),     # 0.2*att
            ],
            out_specs=pl.BlockSpec((tq, Hp), lambda i, k: (i, 0)),
            scratch_shapes=[pltpu.VMEM((tq, 1), jnp.float32),    # running max
                            pltpu.VMEM((tq, 1), jnp.float32),    # running denom
                            pltpu.VMEM((tq, Hp), jnp.float32)]), # accumulator
        compiler_params=pltpu.CompilerParams(
            dimension_semantics=("parallel", "arbitrary"),
            vmem_limit_bytes=VMEM_LIMIT),
    )(xr, xl, adj, bias, att08, att02)


# ---------------------------------------------------------------------------
# Kernel 3: global mean pool + classifier, tiled over nodes (reduction grid).
# ---------------------------------------------------------------------------
def pool_classify_kernel(pool_ref, h_ref, wc_ref, bc_ref, o_ref, acc_ref):
    k = pl.program_id(0)

    @pl.when(k == 0)
    def _():
        acc_ref[...] = jnp.zeros(acc_ref.shape, acc_ref.dtype)

    acc_ref[...] += jnp.dot(pool_ref[...], h_ref[...],
                            preferred_element_type=jnp.float32)    # [Bp, Hp]

    @pl.when(k == pl.num_programs(0) - 1)
    def _():
        o_ref[...] = jnp.dot(acc_ref[...], wc_ref[...],
                             preferred_element_type=jnp.float32) + bc_ref[...]


def pool_classify(pool, h, wc, bc, *, tp=128):
    Bp, Np = pool.shape
    Hp = h.shape[1]
    C = wc.shape[1]
    nk = Np // tp
    full = lambda shape: pl.BlockSpec(shape, lambda k: (0,) * len(shape))
    return pl.pallas_call(
        pool_classify_kernel,
        out_shape=jax.ShapeDtypeStruct((Bp, C), jnp.float32),
        grid_spec=pltpu.PrefetchScalarGridSpec(
            num_scalar_prefetch=0, grid=(nk,),
            in_specs=[pl.BlockSpec((Bp, tp), lambda k: (0, k)),
                      pl.BlockSpec((tp, Hp), lambda k: (k, 0)),
                      full((Hp, C)), full((1, C))],
            out_specs=pl.BlockSpec((Bp, C), lambda k: (0, 0)),
            scratch_shapes=[pltpu.VMEM((Bp, Hp), jnp.float32)]),
        compiler_params=pltpu.CompilerParams(
            dimension_semantics=("arbitrary",), vmem_limit_bytes=VMEM_LIMIT),
    )(pool, h, wc, bc)


# ---------------------------------------------------------------------------
# Parameter init (logical shapes, deterministic) + padding / folding / dtypes.
# ---------------------------------------------------------------------------
def init_params(key, in_feat, hidden, num_classes, num_layers):
    keys = jax.random.split(key, 2 + num_layers)
    scale = 0.1

    def lin(k, din, dout):
        kw, kb = jax.random.split(k)
        return (scale * jax.random.normal(kw, (din, dout), jnp.float32),
                scale * jax.random.normal(kb, (1, dout), jnp.float32))

    params = {}
    params["we"], params["be"] = lin(keys[0], 1, hidden)
    convs = []
    din = in_feat + hidden
    for l in range(num_layers):
        k_l, k_r, k_a, k_b = jax.random.split(keys[1 + l], 4)
        wl, bl = lin(k_l, din, hidden)
        wr, br = lin(k_r, din, hidden)
        att = scale * jax.random.normal(k_a, (1, hidden), jnp.float32)
        bias = scale * jax.random.normal(k_b, (1, hidden), jnp.float32)
        convs.append(dict(wl=wl, bl=bl, wr=wr, br=br, att=att, bias=bias))
        din = hidden
    params["convs"] = convs
    params["wc"], params["bc"] = lin(keys[-1], hidden, num_classes)
    return params


def prepare_params(params, in_feat, hidden, num_classes):
    """Pad hidden dim to a lane multiple, fold constants into weights, cast
    matmul operands to bf16.  Zero padding keeps padded lanes exactly zero."""
    Hp = _round_up(hidden, LANE)

    def pad2(a, r, c):
        return jnp.zeros((r, c), a.dtype).at[:a.shape[0], :a.shape[1]].set(a)

    # Fold edge_emb Linear(1->H) into the first conv weights:
    #   e2n = s_col*we + deg*be = [s_col, deg] @ W_sd
    #   [x | e2n] @ W = [x | s_col | deg] @ [[W_x],[W_sd @ W_e]]   (exact, f32)
    w_sd = jnp.concatenate([params["we"], params["be"]], axis=0)     # (2, H)

    convs = []
    for li, cp in enumerate(params["convs"]):
        if li == 0:
            wl = jnp.concatenate([cp["wl"][:in_feat], w_sd @ cp["wl"][in_feat:]], 0)
            wr = jnp.concatenate([cp["wr"][:in_feat], w_sd @ cp["wr"][in_feat:]], 0)
            kin = in_feat + 2
        else:
            wl, wr = cp["wl"], cp["wr"]
            kin = Hp
        convs.append(dict(
            wl=pad2(wl, kin, Hp).astype(jnp.bfloat16),
            wr=pad2(wr, kin, Hp).astype(jnp.bfloat16),
            bl=pad2(cp["bl"], 1, Hp),
            br=pad2(cp["br"], 1, Hp),
            bias=pad2(cp["bias"], 1, Hp),
            att08=(0.8 * pad2(cp["att"], 1, Hp)).astype(jnp.bfloat16),
            att02=(0.2 * pad2(cp["att"], 1, Hp)).astype(jnp.bfloat16),
        ))
    dp = {"convs": convs,
          "wc": pad2(params["wc"], Hp, num_classes),     # f32 (tiny, exact)
          "bc": params["bc"]}
    return dp, Hp


# ---------------------------------------------------------------------------
# Full forward pass.
# ---------------------------------------------------------------------------
def edge_attr_gat_forward(x, edge_index, edge_attr, batch, params, num_graphs,
                          *, tq=128, tk=128):
    N, F = x.shape
    hidden = params["we"].shape[1]
    num_classes = params["wc"].shape[1]
    dp, Hp = prepare_params(params, F, hidden, num_classes)

    Np = _round_up(max(N, LANE), LANE)
    tq = min(tq, Np)
    tk = min(tk, Np)
    tm = 256 if Np % 256 == 0 else 128        # bigger M on real sizes (v6e/v7x MXU)

    row, col = edge_index[0], edge_index[1]   # row = source, col = target

    # Host-side graph prep (O(E) data plumbing): per-source-node edge_attr sum
    # and out-degree; layer-1 input is [x | s_col | deg] (no [N,E] scatter, no
    # [N, F+H] concat).
    s_col = jax.ops.segment_sum(edge_attr[:, 0], row, num_segments=Np)
    deg = jax.ops.segment_sum(jnp.ones_like(edge_attr[:, 0]), row, num_segments=Np)
    xa = jnp.zeros((Np, F + 2), jnp.float32)
    xa = xa.at[:N, :F].set(x).at[:, F].set(s_col).at[:, F + 1].set(deg)
    xa = xa.astype(jnp.bfloat16)

    # Additive adjacency mask: 0 where edge j->i or i==j (self loop), else -3e38.
    iota = jnp.arange(Np)
    adj = jnp.full((Np, Np), ADJ_MASK, jnp.float32)
    adj = adj.at[col, row].set(0.0)
    adj = adj.at[iota, iota].set(0.0)
    adj = adj.astype(jnp.bfloat16)

    h = xa
    for cp in dp["convs"]:
        xl, xr = gat_project(h, cp["wl"], cp["bl"], cp["wr"], cp["br"], tm=tm)
        h = gat_flash(xr, xl, adj, cp["bias"], cp["att08"], cp["att02"],
                      tq=tq, tk=tk)

    # global_mean_pool as a dense [Bp, Np] matrix (f32; zero rows/cols on pad).
    Bp = _round_up(max(num_graphs, 8), 8)
    batch_p = jnp.full((Np,), -1, jnp.int32).at[:N].set(batch)
    onehot = (batch_p[None, :] == jnp.arange(Bp)[:, None]).astype(jnp.float32)
    counts = jnp.maximum(onehot.sum(axis=1, keepdims=True), 1.0)
    pool = onehot / counts

    out = pool_classify(pool, h, dp["wc"], dp["bc"], tp=tm)
    return out[:num_graphs]


if __name__ == "__main__":
    key = jax.random.PRNGKey(0)
    NUM_GRAPHS = 2
    NODES_PER_GRAPH = 8
    N = NUM_GRAPHS * NODES_PER_GRAPH
    IN_FEAT = 8
    HIDDEN = 32
    NUM_CLASSES = 4
    NUM_LAYERS = 3

    # Deterministic graph: bidirectional ring inside each graph.
    src, dst = [], []
    for g in range(NUM_GRAPHS):
        base = g * NODES_PER_GRAPH
        for i in range(NODES_PER_GRAPH):
            j = (i + 1) % NODES_PER_GRAPH
            src += [base + i, base + j]
            dst += [base + j, base + i]
    edge_index = jnp.array([src, dst], dtype=jnp.int32)                 # [2, E]
    E = edge_index.shape[1]

    k_x, k_e, k_p = jax.random.split(key, 3)
    x = jax.random.normal(k_x, (N, IN_FEAT), dtype=jnp.float32)
    edge_attr = jax.random.normal(k_e, (E, 1), dtype=jnp.float32)
    batch = jnp.repeat(jnp.arange(NUM_GRAPHS, dtype=jnp.int32), NODES_PER_GRAPH)

    params = init_params(k_p, IN_FEAT, HIDDEN, NUM_CLASSES, NUM_LAYERS)

    out = edge_attr_gat_forward(x, edge_index, edge_attr, batch, params,
                                num_graphs=NUM_GRAPHS)
    jax.block_until_ready(out)
    assert out.shape == (NUM_GRAPHS, NUM_CLASSES)
    print("KERNEL_OK")
</pallas_src>

<mosaic_0001>
module attributes {stable_mosaic.version = 11 : i64} {
  func.func @proj_kernel(%arg0: i32, %arg1: memref<128x10xbf16, #tpu.memory_space<vmem>>, %arg2: memref<10x128xbf16, #tpu.memory_space<vmem>>, %arg3: memref<1x128xf32, #tpu.memory_space<vmem>>, %arg4: memref<10x128xbf16, #tpu.memory_space<vmem>>, %arg5: memref<1x128xf32, #tpu.memory_space<vmem>>, %arg6: memref<128x128xbf16, #tpu.memory_space<vmem>>, %arg7: memref<128x128xbf16, #tpu.memory_space<vmem>>) attributes {dimension_semantics = [#tpu.dimension_semantics<parallel>], iteration_bounds = array<i64: 1>, scalar_prefetch = 0 : i64, scratch_operands = 0 : i64, tpu.core_type = #tpu.core_type<tc>, window_params = [{transform_indices = @transform_0, window_bounds = array<i64: 128, 10>}, {pipeline_mode = #tpu.pipeline_mode<synchronous>, transform_indices = @transform_1, window_bounds = array<i64: 10, 128>}, {pipeline_mode = #tpu.pipeline_mode<synchronous>, transform_indices = @transform_2, window_bounds = array<i64: 1, 128>}, {pipeline_mode = #tpu.pipeline_mode<synchronous>, transform_indices = @transform_3, window_bounds = array<i64: 10, 128>}, {pipeline_mode = #tpu.pipeline_mode<synchronous>, transform_indices = @transform_4, window_bounds = array<i64: 1, 128>}, {transform_indices = @transform_5, window_bounds = array<i64: 128, 128>}, {transform_indices = @transform_6, window_bounds = array<i64: 128, 128>}]} {
    %c0 = arith.constant 0 : index
    %c0_0 = arith.constant 0 : index
    %0 = vector.load %arg1[%c0, %c0_0] : memref<128x10xbf16, #tpu.memory_space<vmem>>, vector<128x10xbf16>
    %c0_1 = arith.constant 0 : index
    %c0_2 = arith.constant 0 : index
    %1 = vector.load %arg2[%c0_1, %c0_2] : memref<10x128xbf16, #tpu.memory_space<vmem>>, vector<10x128xbf16>
    %cst = arith.constant dense<0.000000e+00> : vector<128x128xf32>
    %2 = tpu.matmul %0, %1, %cst {dimension_numbers = #tpu.dot_dimension_numbers<[1], [0], [0], [1], [0, 0, 1, 1], [], []>} : vector<128x10xbf16>, vector<10x128xbf16>, vector<128x128xf32> -> vector<128x128xf32>
    %c0_3 = arith.constant 0 : index
    %c0_4 = arith.constant 0 : index
    %3 = vector.load %arg3[%c0_3, %c0_4] : memref<1x128xf32, #tpu.memory_space<vmem>>, vector<1x128xf32>
    %4 = vector.broadcast %3 : vector<1x128xf32> to vector<128x128xf32>
    %5 = arith.addf %2, %4 : vector<128x128xf32>
    %c0_5 = arith.constant 0 : index
    %c0_6 = arith.constant 0 : index
    %6 = vector.load %arg4[%c0_5, %c0_6] : memref<10x128xbf16, #tpu.memory_space<vmem>>, vector<10x128xbf16>
    %cst_7 = arith.constant dense<0.000000e+00> : vector<128x128xf32>
    %7 = tpu.matmul %0, %6, %cst_7 {dimension_numbers = #tpu.dot_dimension_numbers<[1], [0], [0], [1], [0, 0, 1, 1], [], []>} : vector<128x10xbf16>, vector<10x128xbf16>, vector<128x128xf32> -> vector<128x128xf32>
    %c0_8 = arith.constant 0 : index
    %c0_9 = arith.constant 0 : index
    %8 = vector.load %arg5[%c0_8, %c0_9] : memref<1x128xf32, #tpu.memory_space<vmem>>, vector<1x128xf32>
    %9 = vector.broadcast %8 : vector<1x128xf32> to vector<128x128xf32>
    %10 = arith.addf %7, %9 : vector<128x128xf32>
    %11 = arith.truncf %5 : vector<128x128xf32> to vector<128x128xbf16>
    %c0_10 = arith.constant 0 : index
    %c0_11 = arith.constant 0 : index
    %12 = vector.load %arg6[%c0_10, %c0_11] : memref<128x128xbf16, #tpu.memory_space<vmem>>, vector<128x128xbf16>
    tpu.vector_store %arg6[%c0_10, %c0_11], %11 {strides = array<i32>} : memref<128x128xbf16, #tpu.memory_space<vmem>>, vector<128x128xbf16>,
    %13 = arith.truncf %10 : vector<128x128xf32> to vector<128x128xbf16>
    %c0_12 = arith.constant 0 : index
    %c0_13 = arith.constant 0 : index
    %14 = vector.load %arg7[%c0_12, %c0_13] : memref<128x128xbf16, #tpu.memory_space<vmem>>, vector<128x128xbf16>
    tpu.vector_store %arg7[%c0_12, %c0_13], %13 {strides = array<i32>} : memref<128x128xbf16, #tpu.memory_space<vmem>>, vector<128x128xbf16>,
    return
  }
  func.func @transform_0(%arg0: i32) -> (i32, i32) {
    %c0_i32 = arith.constant 0 : i32
    %c0_i32_0 = arith.constant 0 : i32
    return %arg0, %c0_i32 : i32, i32
  }
  func.func @transform_1(%arg0: i32) -> (i32, i32) {
    %c0_i32 = arith.constant 0 : i32
    %c0_i32_0 = arith.constant 0 : i32
    %c0_i32_1 = arith.constant 0 : i32
    return %c0_i32, %c0_i32_0 : i32, i32
  }
  func.func @transform_2(%arg0: i32) -> (i32, i32) {
    %c0_i32 = arith.constant 0 : i32
    %c0_i32_0 = arith.constant 0 : i32
    %c0_i32_1 = arith.constant 0 : i32
    return %c0_i32, %c0_i32_0 : i32, i32
  }
  func.func @transform_3(%arg0: i32) -> (i32, i32) {
    %c0_i32 = arith.constant 0 : i32
    %c0_i32_0 = arith.constant 0 : i32
    %c0_i32_1 = arith.constant 0 : i32
    return %c0_i32, %c0_i32_0 : i32, i32
  }
  func.func @transform_4(%arg0: i32) -> (i32, i32) {
    %c0_i32 = arith.constant 0 : i32
    %c0_i32_0 = arith.constant 0 : i32
    %c0_i32_1 = arith.constant 0 : i32
    return %c0_i32, %c0_i32_0 : i32, i32
  }
  func.func @transform_5(%arg0: i32) -> (i32, i32) {
    %c0_i32 = arith.constant 0 : i32
    %c0_i32_0 = arith.constant 0 : i32
    return %arg0, %c0_i32 : i32, i32
  }
  func.func @transform_6(%arg0: i32) -> (i32, i32) {
    %c0_i32 = arith.constant 0 : i32
    %c0_i32_0 = arith.constant 0 : i32
    return %arg0, %c0_i32 : i32, i32
  }
}

</mosaic_0001>

<llo_original>
// kernel: tpu_custom_call.1
$region0: #{tpu_custom_call.1}
  #allocation0 [shape = 'u32[]', space=smem, size = 0x4, offset = 0x4, fixed_abs, tag = 'smem constant byte address 0x4 - core index']
  #allocation1 [shape = 'u32[144,128]{1,0:T(1,128)}', space=vmem, size = 0x12000, scoped, tag = 'internal scratch']
  %s0 = inlined_call_operand.vmem [shape: bf16[128,10], index: 0, kind: input, shape index: {}]
  %s1 = inlined_call_operand.vmem [shape: bf16[10,128], index: 1, kind: input, shape index: {}]
  %s2 = inlined_call_operand.vmem [shape: f32[1,128], index: 2, kind: input, shape index: {}]
  %s3 = inlined_call_operand.vmem [shape: bf16[10,128], index: 3, kind: input, shape index: {}]
  %s4 = inlined_call_operand.vmem [shape: f32[1,128], index: 4, kind: input, shape index: {}]
  %s5 = inlined_call_operand.hbm [shape: bf16[128,128], index: 5, kind: output, shape index: {0}]
  %s6 = inlined_call_operand.hbm [shape: bf16[128,128], index: 6, kind: output, shape index: {1}]
  %7 = xla_tuple %s5, %s6
  %s8 = sld [smem:[#allocation0]]
  $region38: #{tpu_custom_call.1} parent=0
    _
  %s10 = ssub.s32 1, %s8
  %s11 = scalar_select 0, %s10, %s8
  $region1: #{tpu_custom_call.1} parent=0
    #allocation2 [shape = 'u8[32768]{0}', space=vmem, size = 0x8000, scoped, tag = 'output window, operand 0, single buffered']
    #allocation3 [shape = 's32[1]{0}', space=sflag, size = 0x4, scoped, tag = 'scoped memory for tpu_custom_call.1']
    #allocation4 [shape = 'u8[32768]{0}', space=vmem, size = 0x8000, scoped, tag = 'output window, operand 1, single buffered']
    #allocation5 [shape = 's32[1]{0}', space=sflag, size = 0x4, scoped, tag = 'scoped memory for tpu_custom_call.1']
    %12 = vsyncpa [#allocation3], 0
    %13 = vsyncpa [#allocation5], 0
    // Predicated region
    $region2: #{tpu_custom_call.1} parent=1 // pred_check
      _
    $region3: #{tpu_custom_call.1} parent=1 // pred_check_branch
      %15 = sbr.rel (0) target = $region5
    $region4: #{tpu_custom_call.1} parent=1 // pred_region
      _
    $region5: #{tpu_custom_call.1} parent=1 // pred_fallthru
      _
    // Predicated region
    $region6: #{tpu_custom_call.1} parent=1 // pred_check
      _
    $region7: #{tpu_custom_call.1} parent=1 // pred_check_branch
      %17 = sbr.rel (0) target = $region9
    $region8: #{tpu_custom_call.1} parent=1 // pred_region
      _
    $region9: #{tpu_custom_call.1} parent=1 // pred_fallthru
      _
    // Predicated region
    $region10: #{tpu_custom_call.1} parent=1 // pred_check
      _
    $region11: #{tpu_custom_call.1} parent=1 // pred_check_branch
      %19 = sbr.rel (0) target = $region13
    $region12: #{tpu_custom_call.1} parent=1 // pred_region
      _
    $region13: #{tpu_custom_call.1} parent=1 // pred_fallthru
      _
    // Predicated region
    $region14: #{tpu_custom_call.1} parent=1 // pred_check
      _
    $region15: #{tpu_custom_call.1} parent=1 // pred_check_branch
      %21 = sbr.rel (0) target = $region17
    $region16: #{tpu_custom_call.1} parent=1 // pred_region
      _
    $region17: #{tpu_custom_call.1} parent=1 // pred_fallthru
      _
    // Predicated region
    $region18: #{tpu_custom_call.1} parent=1 // pred_check
      _
    $region19: #{tpu_custom_call.1} parent=1 // pred_check_branch
      %23 = sbr.rel (0) target = $region21
    $region20: #{tpu_custom_call.1} parent=1 // pred_region
      _
    $region21: #{tpu_custom_call.1} parent=1 // pred_fallthru
      _
    %v25 = vld [vmem:[%s0] sm:$0xf]
    %v26 = vld [vmem:[%s0 + $0x4] sm:$0xf]
    %v27 = vld [vmem:[%s0 + $0x8] sm:$0xf]
    %v28 = vld [vmem:[%s0 + $0xc] sm:$0xf]
    %v29 = vld [vmem:[%s0 + $0x10] sm:$0xf]
    %v30 = vld [vmem:[%s0 + $0x14] sm:$0xf]
    %v31 = vld [vmem:[%s0 + $0x18] sm:$0xf]
    %v32 = vld [vmem:[%s0 + $0x1c] sm:$0xf]
    %v33 = vld [vmem:[%s0 + $0x20] sm:$0xf]
    %v34 = vld [vmem:[%s0 + $0x24] sm:$0xf]
    %v35 = vld [vmem:[%s0 + $0x28] sm:$0xf]
    %v36 = vld [vmem:[%s0 + $0x2c] sm:$0xf]
    %v37 = vld [vmem:[%s0 + $0x30] sm:$0xf]
    %v38 = vld [vmem:[%s0 + $0x34] sm:$0xf]
    %v39 = vld [vmem:[%s0 + $0x38] sm:$0xf]
    %v40 = vld [vmem:[%s0 + $0x3c] sm:$0xf]
    %v41 = vld [vmem:[%s1] sm:$0xf]
    %v42 = vld [vmem:[%s1 + $0x4] sm:$0x1]
    %v43 = vld [vmem:[%s2] sm:$0x1]
    %v45 = vlaneseq
    %v46 = vshrl.u32 %v45, 7
    %v47 = vsub.s32 0, %v46
    %v48 = vrot.slane %v43, %v47
    %v66 = vunpack.c.l.b16 %v25
    %v67 = vunpack.c.l.b16 %v26
    %v68 = vunpack.c.l.b16 %v27
    %v69 = vunpack.c.l.b16 %v28
    %v70 = vunpack.c.l.b16 %v29
    %v71 = vunpack.c.l.b16 %v30
    %v72 = vunpack.c.l.b16 %v31
    %v73 = vunpack.c.l.b16 %v32
    %v74 = vunpack.c.l.b16 %v33
    %v75 = vunpack.c.l.b16 %v34
    %v76 = vunpack.c.l.b16 %v35
    %v77 = vunpack.c.l.b16 %v36
    %v78 = vunpack.c.l.b16 %v37
    %v79 = vunpack.c.l.b16 %v38
    %v80 = vunpack.c.l.b16 %v39
    %v81 = vunpack.c.l.b16 %v40
    %v82 = vpack.c.b16 %v67, %v66
    %v83 = vpack.c.b16 %v69, %v68
    %v84 = vpack.c.b16 %v71, %v70
    %v85 = vpack.c.b16 %v73, %v72
    %v86 = vpack.c.b16 %v75, %v74
    %v87 = vpack.c.b16 %v77, %v76
    %v88 = vpack.c.b16 %v79, %v78
    %v89 = vpack.c.b16 %v81, %v80
    %v92 = vunpack.c.l.b16 %v41
    %v93 = vunpack.c.l.b16 %v42
    %v94 = vpack.c.b16 %v93, %v92
    %vm95 = vcmask 80896
    %v97 = vsel %vm95, %v82, 0
    %v100 = vsel %vm95, %v83, 0
    %v103 = vsel %vm95, %v84, 0
    %v106 = vsel %vm95, %v85, 0
    %v109 = vsel %vm95, %v86, 0
    %v112 = vsel %vm95, %v87, 0
    %v115 = vsel %vm95, %v88, 0
    %v118 = vsel %vm95, %v89, 0
    %vm120 = vcmask 1044480
    %v122 = vsel %vm120, %v94, 0
    %124 = vmatprep.subr.bf16.mxu0 0
    %125 = vmatpush1.bf16.msra.mxu0 %v122
    %126 = vmatprep.subr.bf16.mxu0 0
    %127 = vmatpush1.bf16.msra.mxu0 0
    %128 = vmatprep.subr.bf16.mxu0 0
    %129 = vmatpush1.bf16.msra.mxu0 0
    %130 = vmatprep.subr.bf16.mxu0 0
    %131 = vmatpush1.bf16.msra.mxu0 0
    %132 = vmatprep.subr.bf16.mxu0 0
    %133 = vmatpush1.bf16.msra.mxu0 0
    %134 = vmatprep.subr.bf16.mxu0 0
    %135 = vmatpush1.bf16.msra.mxu0 0
    %136 = vmatprep.subr.bf16.mxu0 0
    %137 = vmatpush1.bf16.msra.mxu0 0
    %138 = vmatprep.subr.bf16.mxu0 0
    %139 = vmatpush1.bf16.msra.mxu0 0
    %140 = vmatprep.subr.bf16.mxu0 0
    %141 = vmatpush1.bf16.msra.mxu0 0
    %142 = vmatprep.subr.bf16.mxu0 0
    %143 = vmatpush1.bf16.msra.mxu0 0
    %144 = vmatprep.subr.bf16.mxu0 0
    %145 = vmatpush1.bf16.msra.mxu0 0
    %146 = vmatprep.subr.bf16.mxu0 0
    %147 = vmatpush1.bf16.msra.mxu0 0
    %148 = vmatprep.subr.bf16.mxu0 0
    %149 = vmatpush1.bf16.msra.mxu0 0
    %150 = vmatprep.subr.bf16.mxu0 0
    %151 = vmatpush1.bf16.msra.mxu0 0
    %152 = vmatprep.subr.bf16.mxu0 0
    %153 = vmatpush1.bf16.msra.mxu0 0
    %154 = vmatprep.subr.bf16.mxu0 0
    %155 = vmatpush1.bf16.msra.mxu0 0
    %156 = vmatprep.mubr.bf16.mxu0 0
    %157 = vmatmul.mubr.bf16.gmra.mrb[0].mxu0 %v97
    %v158 = vpop.f32.mrb[0].mxu0
    %v159 = vadd.f32 %v48, %v158
    %v160 = vpop.f32.mrb[0].mxu0
    %v161 = vpop.f32.mrb[0].mxu0
    %v162 = vadd.f32 %v48, %v161
    %v163 = vpop.f32.mrb[0].mxu0
    %164 = vmatprep.mubr.bf16.mxu0 0
    %165 = vmatmul.mubr.bf16.gmra.mrb[0].mxu0 %v100
    %v166 = vpop.f32.mrb[0].mxu0
    %v167 = vadd.f32 %v48, %v166
    %v168 = vpop.f32.mrb[0].mxu0
    %v169 = vpop.f32.mrb[0].mxu0
    %v170 = vadd.f32 %v48, %v169
    %v171 = vpop.f32.mrb[0].mxu0
    %172 = vmatprep.mubr.bf16.mxu0 0
    %173 = vmatmul.mubr.bf16.gmra.mrb[0].mxu0 %v103
    %v174 = vpop.f32.mrb[0].mxu0
    %v175 = vadd.f32 %v48, %v174
    %v176 = vpop.f32.mrb[0].mxu0
    %v177 = vpop.f32.mrb[0].mxu0
    %v178 = vadd.f32 %v48, %v177
    %v179 = vpop.f32.mrb[0].mxu0
    %180 = vmatprep.mubr.bf16.mxu0 0
    %181 = vmatmul.mubr.bf16.gmra.mrb[0].mxu0 %v106
    %v182 = vpop.f32.mrb[0].mxu0
    %v183 = vadd.f32 %v48, %v182
    %v184 = vpop.f32.mrb[0].mxu0
    %v185 = vpop.f32.mrb[0].mxu0
    %v186 = vadd.f32 %v48, %v185
    %v187 = vpop.f32.mrb[0].mxu0
    %188 = vmatprep.mubr.bf16.mxu0 0
    %189 = vmatmul.mubr.bf16.gmra.mrb[0].mxu0 %v109
    %v190 = vpop.f32.mrb[0].mxu0
    %v191 = vadd.f32 %v48, %v190
    %v192 = vpop.f32.mrb[0].mxu0
    %v193 = vpop.f32.mrb[0].mxu0
    %v194 = vadd.f32 %v48, %v193
    %v195 = vpop.f32.mrb[0].mxu0
    %196 = vmatprep.mubr.bf16.mxu0 0
    %197 = vmatmul.mubr.bf16.gmra.mrb[0].mxu0 %v112
    %v198 = vpop.f32.mrb[0].mxu0
    %v199 = vadd.f32 %v48, %v198
    %v200 = vpop.f32.mrb[0].mxu0
    %v201 = vpop.f32.mrb[0].mxu0
    %v202 = vadd.f32 %v48, %v201
    %v203 = vpop.f32.mrb[0].mxu0
    %204 = vmatprep.mubr.bf16.mxu0 0
    %205 = vmatmul.mubr.bf16.gmra.mrb[0].mxu0 %v115
    %v206 = vpop.f32.mrb[0].mxu0
    %v207 = vadd.f32 %v48, %v206
    %v208 = vpop.f32.mrb[0].mxu0
    %v209 = vpop.f32.mrb[0].mxu0
    %v210 = vadd.f32 %v48, %v209
    %v211 = vpop.f32.mrb[0].mxu0
    %212 = vmatprep.mubr.bf16.mxu0 0
    %213 = vmatmul.mubr.bf16.gmra.mrb[0].mxu0 %v118
    %v214 = vpop.f32.mrb[0].mxu0
    %v215 = vadd.f32 %v48, %v214
    %v216 = vpop.f32.mrb[0].mxu0
    %v217 = vpop.f32.mrb[0].mxu0
    %v218 = vadd.f32 %v48, %v217
    %v219 = vpop.f32.mrb[0].mxu0
    %220 = vdwg.mxu0
    %v221 = vld [vmem:[%s3] sm:$0xf]
    %v222 = vld [vmem:[%s3 + $0x4] sm:$0x1]
    %v223 = vld [vmem:[%s4] sm:$0x1]
    %v225 = vlaneseq
    %v226 = vshrl.u32 %v225, 7
    %v227 = vsub.s32 0, %v226
    %v228 = vrot.slane %v223, %v227
    %v232 = vunpack.c.l.b16 %v221
    %v233 = vunpack.c.l.b16 %v222
    %v234 = vpack.c.b16 %v233, %v232
    %v236 = vsel %vm120, %v234, 0
    %238 = vmatprep.subr.bf16.mxu0 0
    %239 = vmatpush1.bf16.msra.mxu0 %v236
    %240 = vmatprep.subr.bf16.mxu0 0
    %241 = vmatpush1.bf16.msra.mxu0 0
    %242 = vmatprep.subr.bf16.mxu0 0
    %243 = vmatpush1.bf16.msra.mxu0 0
    %244 = vmatprep.subr.bf16.mxu0 0
    %245 = vmatpush1.bf16.msra.mxu0 0
    %246 = vmatprep.subr.bf16.mxu0 0
    %247 = vmatpush1.bf16.msra.mxu0 0
    %248 = vmatprep.subr.bf16.mxu0 0
    %249 = vmatpush1.bf16.msra.mxu0 0
    %250 = vmatprep.subr.bf16.mxu0 0
    %251 = vmatpush1.bf16.msra.mxu0 0
    %252 = vmatprep.subr.bf16.mxu0 0
    %253 = vmatpush1.bf16.msra.mxu0 0
    %254 = vmatprep.subr.bf16.mxu0 0
    %255 = vmatpush1.bf16.msra.mxu0 0
    %256 = vmatprep.subr.bf16.mxu0 0
    %257 = vmatpush1.bf16.msra.mxu0 0
    %258 = vmatprep.subr.bf16.mxu0 0
    %259 = vmatpush1.bf16.msra.mxu0 0
    %260 = vmatprep.subr.bf16.mxu0 0
    %261 = vmatpush1.bf16.msra.mxu0 0
    %262 = vmatprep.subr.bf16.mxu0 0
    %263 = vmatpush1.bf16.msra.mxu0 0
    %264 = vmatprep.subr.bf16.mxu0 0
    %265 = vmatpush1.bf16.msra.mxu0 0
    %266 = vmatprep.subr.bf16.mxu0 0
    %267 = vmatpush1.bf16.msra.mxu0 0
    %268 = vmatprep.subr.bf16.mxu0 0
    %269 = vmatpush1.bf16.msra.mxu0 0
    %270 = vmatprep.mubr.bf16.mxu0 0
    %271 = vmatmul.mubr.bf16.gmra.mrb[0].mxu0 %v97
    %v272 = vpop.f32.mrb[0].mxu0
    %v273 = vadd.f32 %v228, %v272
    %v274 = vpop.f32.mrb[0].mxu0
    %v275 = vpop.f32.mrb[0].mxu0
    %v276 = vadd.f32 %v228, %v275
    %v277 = vpop.f32.mrb[0].mxu0
    %278 = vmatprep.mubr.bf16.mxu0 0
    %279 = vmatmul.mubr.bf16.gmra.mrb[0].mxu0 %v100
    %v280 = vpop.f32.mrb[0].mxu0
    %v281 = vadd.f32 %v228, %v280
    %v282 = vpop.f32.mrb[0].mxu0
    %v283 = vpop.f32.mrb[0].mxu0
    %v284 = vadd.f32 %v228, %v283
    %v285 = vpop.f32.mrb[0].mxu0
    %286 = vmatprep.mubr.bf16.mxu0 0
    %287 = vmatmul.mubr.bf16.gmra.mrb[0].mxu0 %v103
    %v288 = vpop.f32.mrb[0].mxu0
    %v289 = vadd.f32 %v228, %v288
    %v290 = vpop.f32.mrb[0].mxu0
    %v291 = vpop.f32.mrb[0].mxu0
    %v292 = vadd.f32 %v228, %v291
    %v293 = vpop.f32.mrb[0].mxu0
    %294 = vmatprep.mubr.bf16.mxu0 0
    %295 = vmatmul.mubr.bf16.gmra.mrb[0].mxu0 %v106
    %v296 = vpop.f32.mrb[0].mxu0
    %v297 = vadd.f32 %v228, %v296
    %v298 = vpop.f32.mrb[0].mxu0
    %v299 = vpop.f32.mrb[0].mxu0
    %v300 = vadd.f32 %v228, %v299
    %v301 = vpop.f32.mrb[0].mxu0
    %302 = vmatprep.mubr.bf16.mxu0 0
    %303 = vmatmul.mubr.bf16.gmra.mrb[0].mxu0 %v109
    %v304 = vpop.f32.mrb[0].mxu0
    %v305 = vadd.f32 %v228, %v304
    %v306 = vpop.f32.mrb[0].mxu0
    %v307 = vpop.f32.mrb[0].mxu0
    %v308 = vadd.f32 %v228, %v307
    %v309 = vpop.f32.mrb[0].mxu0
    %310 = vmatprep.mubr.bf16.mxu0 0
    %311 = vmatmul.mubr.bf16.gmra.mrb[0].mxu0 %v112
    %v312 = vpop.f32.mrb[0].mxu0
    %v313 = vadd.f32 %v228, %v312
    %v314 = vpop.f32.mrb[0].mxu0
    %v315 = vpop.f32.mrb[0].mxu0
    %v316 = vadd.f32 %v228, %v315
    %v317 = vpop.f32.mrb[0].mxu0
    %318 = vmatprep.mubr.bf16.mxu0 0
    %319 = vmatmul.mubr.bf16.gmra.mrb[0].mxu0 %v115
    %v320 = vpop.f32.mrb[0].mxu0
    %v321 = vadd.f32 %v228, %v320
    %v322 = vpop.f32.mrb[0].mxu0
    %v323 = vpop.f32.mrb[0].mxu0
    %v324 = vadd.f32 %v228, %v323
    %v325 = vpop.f32.mrb[0].mxu0
    %326 = vmatprep.mubr.bf16.mxu0 0
    %327 = vmatmul.mubr.bf16.gmra.mrb[0].mxu0 %v118
    %v328 = vpop.f32.mrb[0].mxu0
    %v329 = vadd.f32 %v228, %v328
    %v330 = vpop.f32.mrb[0].mxu0
    %v331 = vpop.f32.mrb[0].mxu0
    %v332 = vadd.f32 %v228, %v331
    %v333 = vpop.f32.mrb[0].mxu0
    %334 = vdwg.mxu0
    %v335 = vpack.c.bf16 %v162, %v159
    %v336 = vpack.c.bf16 %v170, %v167
    %v337 = vpack.c.bf16 %v178, %v175
    %v338 = vpack.c.bf16 %v186, %v183
    %v339 = vpack.c.bf16 %v194, %v191
    %v340 = vpack.c.bf16 %v202, %v199
    %v341 = vpack.c.bf16 %v210, %v207
    %v342 = vpack.c.bf16 %v218, %v215
    %v351 = vunpack.c.l.b16 %v335
    %v352 = vunpack.c.h.b16 %v335
    %v353 = vunpack.c.l.b16 %v336
    %v354 = vunpack.c.h.b16 %v336
    %v355 = vunpack.c.l.b16 %v337
    %v356 = vunpack.c.h.b16 %v337
    %v357 = vunpack.c.l.b16 %v338
    %v358 = vunpack.c.h.b16 %v338
    %v359 = vunpack.c.l.b16 %v339
    %v360 = vunpack.c.h.b16 %v339
    %v361 = vunpack.c.l.b16 %v340
    %v362 = vunpack.c.h.b16 %v340
    %v363 = vunpack.c.l.b16 %v341
    %v364 = vunpack.c.h.b16 %v341
    %v365 = vunpack.c.l.b16 %v342
    %v366 = vunpack.c.h.b16 %v342
    %v367 = vpack.c.b16 %v351, %v351
    %v368 = vpack.c.b16 %v352, %v352
    %v369 = vpack.c.b16 %v353, %v353
    %v370 = vpack.c.b16 %v354, %v354
    %v371 = vpack.c.b16 %v355, %v355
    %v372 = vpack.c.b16 %v356, %v356
    %v373 = vpack.c.b16 %v357, %v357
    %v374 = vpack.c.b16 %v358, %v358
    %v375 = vpack.c.b16 %v359, %v359
    %v376 = vpack.c.b16 %v360, %v360
    %v377 = vpack.c.b16 %v361, %v361
    %v378 = vpack.c.b16 %v362, %v362
    %v379 = vpack.c.b16 %v363, %v363
    %v380 = vpack.c.b16 %v364, %v364
    %v381 = vpack.c.b16 %v365, %v365
    %v382 = vpack.c.b16 %v366, %v366
    %399 = vst [vmem:[#allocation2] sm:$0xf] %v367
    %400 = vst [vmem:[#allocation2 + $0x4] sm:$0xf] %v368
    %401 = vst [vmem:[#allocation2 + $0x8] sm:$0xf] %v369
    %402 = vst [vmem:[#allocation2 + $0xc] sm:$0xf] %v370
    %403 = vst [vmem:[#allocation2 + $0x10] sm:$0xf] %v371
    %404 = vst [vmem:[#allocation2 + $0x14] sm:$0xf] %v372
    %405 = vst [vmem:[#allocation2 + $0x18] sm:$0xf] %v373
    %406 = vst [vmem:[#allocation2 + $0x1c] sm:$0xf] %v374
    %407 = vst [vmem:[#allocation2 + $0x20] sm:$0xf] %v375
    %408 = vst [vmem:[#allocation2 + $0x24] sm:$0xf] %v376
    %409 = vst [vmem:[#allocation2 + $0x28] sm:$0xf] %v377
    %410 = vst [vmem:[#allocation2 + $0x2c] sm:$0xf] %v378
    %411 = vst [vmem:[#allocation2 + $0x30] sm:$0xf] %v379
    %412 = vst [vmem:[#allocation2 + $0x34] sm:$0xf] %v380
    %413 = vst [vmem:[#allocation2 + $0x38] sm:$0xf] %v381
    %414 = vst [vmem:[#allocation2 + $0x3c] sm:$0xf] %v382
    %v415 = vpack.c.bf16 %v276, %v273
    %v416 = vpack.c.bf16 %v284, %v281
    %v417 = vpack.c.bf16 %v292, %v289
    %v418 = vpack.c.bf16 %v300, %v297
    %v419 = vpack.c.bf16 %v308, %v305
    %v420 = vpack.c.bf16 %v316, %v313
    %v421 = vpack.c.bf16 %v324, %v321
    %v422 = vpack.c.bf16 %v332, %v329
    %v431 = vunpack.c.l.b16 %v415
    %v432 = vunpack.c.h.b16 %v415
    %v433 = vunpack.c.l.b16 %v416
    %v434 = vunpack.c.h.b16 %v416
    %v435 = vunpack.c.l.b16 %v417
    %v436 = vunpack.c.h.b16 %v417
    %v437 = vunpack.c.l.b16 %v418
    %v438 = vunpack.c.h.b16 %v418
    %v439 = vunpack.c.l.b16 %v419
    %v440 = vunpack.c.h.b16 %v419
    %v441 = vunpack.c.l.b16 %v420
    %v442 = vunpack.c.h.b16 %v420
    %v443 = vunpack.c.l.b16 %v421
    %v444 = vunpack.c.h.b16 %v421
    %v445 = vunpack.c.l.b16 %v422
    %v446 = vunpack.c.h.b16 %v422
    %v447 = vpack.c.b16 %v431, %v431
    %v448 = vpack.c.b16 %v432, %v432
    %v449 = vpack.c.b16 %v433, %v433
    %v450 = vpack.c.b16 %v434, %v434
    %v451 = vpack.c.b16 %v435, %v435
    %v452 = vpack.c.b16 %v436, %v436
    %v453 = vpack.c.b16 %v437, %v437
    %v454 = vpack.c.b16 %v438, %v438
    %v455 = vpack.c.b16 %v439, %v439
    %v456 = vpack.c.b16 %v440, %v440
    %v457 = vpack.c.b16 %v441, %v441
    %v458 = vpack.c.b16 %v442, %v442
    %v459 = vpack.c.b16 %v443, %v443
    %v460 = vpack.c.b16 %v444, %v444
    %v461 = vpack.c.b16 %v445, %v445
    %v462 = vpack.c.b16 %v446, %v446
    %479 = vst [vmem:[#allocation4] sm:$0xf] %v447
    %480 = vst [vmem:[#allocation4 + $0x4] sm:$0xf] %v448
    %481 = vst [vmem:[#allocation4 + $0x8] sm:$0xf] %v449
    %482 = vst [vmem:[#allocation4 + $0xc] sm:$0xf] %v450
    %483 = vst [vmem:[#allocation4 + $0x10] sm:$0xf] %v451
    %484 = vst [vmem:[#allocation4 + $0x14] sm:$0xf] %v452
    %485 = vst [vmem:[#allocation4 + $0x18] sm:$0xf] %v453
    %486 = vst [vmem:[#allocation4 + $0x1c] sm:$0xf] %v454
    %487 = vst [vmem:[#allocation4 + $0x20] sm:$0xf] %v455
    %488 = vst [vmem:[#allocation4 + $0x24] sm:$0xf] %v456
    %489 = vst [vmem:[#allocation4 + $0x28] sm:$0xf] %v457
    %490 = vst [vmem:[#allocation4 + $0x2c] sm:$0xf] %v458
    %491 = vst [vmem:[#allocation4 + $0x30] sm:$0xf] %v459
    %492 = vst [vmem:[#allocation4 + $0x34] sm:$0xf] %v460
    %493 = vst [vmem:[#allocation4 + $0x38] sm:$0xf] %v461
    %494 = vst [vmem:[#allocation4 + $0x3c] sm:$0xf] %v462
    // Predicated region
    $region22: #{tpu_custom_call.1} parent=1 // pred_check
      _
    $region23: #{tpu_custom_call.1} parent=1 // pred_check_branch
      %496 = sbr.rel (0) target = $region25
    $region24: #{tpu_custom_call.1} parent=1 // pred_region
      %s498 = ssub.s32 1024, 1024
      %499 = vsyncadd [#allocation3], %s498
      %s500 = sshll.u32 [#allocation2], 4
      %s501 = int_to_ptr.vmem [resolvable:$true] %s500
      %506 = dma.vmem_to_hbm [thread:$0]  %s501, 1024, %s5, [#allocation3], 64, 64, 4
    $region25: #{tpu_custom_call.1} parent=1 // pred_fallthru
      _
    // Predicated region
    $region26: #{tpu_custom_call.1} parent=1 // pred_check
      _
    $region27: #{tpu_custom_call.1} parent=1 // pred_check_branch
      %508 = sbr.rel (0) target = $region29
    $region28: #{tpu_custom_call.1} parent=1 // pred_region
      %s510 = ssub.s32 1024, 1024
      %511 = vsyncadd [#allocation5], %s510
      %s512 = sshll.u32 [#allocation4], 4
      %s513 = int_to_ptr.vmem [resolvable:$true] %s512
      %518 = dma.vmem_to_hbm [thread:$0]  %s513, 1024, %s6, [#allocation5], 64, 64, 4
    $region29: #{tpu_custom_call.1} parent=1 // pred_fallthru
      _
    // Predicated region
    $region30: #{tpu_custom_call.1} parent=1 // pred_check
      _
    $region31: #{tpu_custom_call.1} parent=1 // pred_check_branch
      %520 = sbr.rel (0) target = $region33
    $region32: #{tpu_custom_call.1} parent=1 // pred_region
      %521 = dma.done [#allocation3], 1024
    $region33: #{tpu_custom_call.1} parent=1 // pred_fallthru
      _
    // Predicated region
    $region34: #{tpu_custom_call.1} parent=1 // pred_check
      _
    $region35: #{tpu_custom_call.1} parent=1 // pred_check_branch
      %523 = sbr.rel (0) target = $region37
    $region36: #{tpu_custom_call.1} parent=1 // pred_region
      %524 = dma.done [#allocation5], 1024
    $region37: #{tpu_custom_call.1} parent=1 // pred_fallthru
      _
    %525 = vsyncpa [#allocation3], 1
    %526 = vsyncpa [#allocation5], 1

</llo_original>
